<compile_context>
chip_gen: v6e
topology: v6e:2x2x1
jax: 0.10.0
libtpu: 0.0.40
codegen_flags: <defaults>
</compile_context>

<pallas_src>
import numpy as np
import jax
import jax.numpy as jnp
from jax.experimental import pallas as pl
from jax.experimental.pallas import tpu as pltpu


def _round_up(x: int, m: int) -> int:
    return ((x + m - 1) // m) * m


def _length_regulator_kernel(tot_ref, ce_ref, c_ref, x_ref, o_ref):
    # tot_ref : (B,)          int32 SMEM  total duration per row (scalar prefetch)
    # ce_ref  : (1, 1, Tmax)  int32       exclusive duration cumsum for row b
    # c_ref   : (1, 1, Tmax)  int32       inclusive duration cumsum for row b
    # x_ref   : (1, Tmax, D)              input embeddings for row b
    # o_ref   : (1, TQ, D)                one output-frame tile
    TQ = o_ref.shape[1]
    b = pl.program_id(0)
    q = pl.program_id(1)
    tile_start = q * TQ
    total = tot_ref[b]

    @pl.when(tile_start < total)
    def _compute():
        # Output-frame indices for this tile as a (TQ, 1) column; comparisons
        # against the (1, Tmax) cumsum rows broadcast to (TQ, Tmax) -- no
        # (T_out, Tmax) plane is ever materialized.
        j = tile_start + jax.lax.broadcasted_iota(jnp.int32, (TQ, 1), 0)
        ce = ce_ref[0]   # (1, Tmax)
        c = c_ref[0]     # (1, Tmax)
        # onehot[j, i] == 1 iff output frame j copies input token i.  Frames
        # past the row's total duration match no token -> zero row -> 0.0 pad.
        # Keep x's native float dtype (NOT int8: no integer MXU on v7x).
        onehot = jnp.logical_and(ce <= j, j < c).astype(x_ref.dtype)
        out = jnp.dot(onehot, x_ref[0], preferred_element_type=jnp.float32)
        o_ref[0] = out.astype(o_ref.dtype)

    @pl.when(tile_start >= total)
    def _pad():
        # Tile is entirely past this row's total duration: skip the compare
        # plane and the matmul, emit zero padding only.
        o_ref[...] = jnp.zeros_like(o_ref)


def length_regulator(xs, ds, ilens, alpha: float = 1.0,
                     max_output_len=None, tile_q: int = 1024,
                     return_padded: bool = False):
    """JAX/Pallas equivalent of LengthRegulator.forward.

    xs   : (B, Tmax, D) float (f32 or bf16)
    ds   : (B, Tmax)    int durations
    ilens: (B,)         int valid input lengths
    max_output_len : optional static output length (bucket).  If None, one
        host sync computes the exact data-dependent max length (matches the
        PyTorch module exactly).  In jit/serving loops pass a bucket to avoid
        the dispatch stall and per-length recompiles.  NOTE: if the bucket is
        smaller than the true max total duration, extra frames are silently
        dropped.
    return_padded  : if True, skip the trailing (full HBM read+write) slice
        and return the (B, T_pad, D) buffer; frames past each row's total
        duration are zeros, only trailing all-zero frames differ from the
        exact-shape result.
    Rows with ilens == 0 produce an all-zero output row (the PyTorch module
    would raise on an empty concatenation).
    """
    assert alpha > 0
    B, Tmax, D = xs.shape
    ds = jnp.asarray(ds, jnp.int32)
    ilens = jnp.asarray(ilens, jnp.int32)

    if alpha != 1.0:
        ds = jnp.round(ds.astype(jnp.float32) * alpha).astype(jnp.int32)

    # Mask durations beyond ilen (equivalent to d[:ilen] truncation).
    t_idx = jnp.arange(Tmax, dtype=jnp.int32)[None, :]
    valid = t_idx < ilens[:, None]
    ds_m = jnp.where(valid, ds, 0)

    # d.sum() == 0 -> d.fill_(1) over the valid (truncated) slice.
    empty = ds_m.sum(axis=1, keepdims=True) == 0
    ds_m = jnp.where(jnp.logical_and(empty, valid), 1, ds_m)

    c = jnp.cumsum(ds_m, axis=1).astype(jnp.int32)   # inclusive cumsum
    ce = (c - ds_m).astype(jnp.int32)                 # exclusive cumsum
    totals = c[:, -1]                                 # (B,) per-row total frames

    # Max output length across the batch.
    if max_output_len is None:
        # Single host round-trip; pass max_output_len to avoid it under jit.
        T_exact = int(jax.device_get(jnp.max(totals)))
    else:
        T_exact = int(max_output_len)
    T_exact = max(T_exact, 1)

    # Output-frame tile: multiple of 128, as large as tile_q allows.
    TQ = min(_round_up(int(tile_q), 128), _round_up(T_exact, 128))
    # Keep at least 2 grid steps when possible so both v7x TensorCores get work.
    while B * (_round_up(T_exact, TQ) // TQ) < 2 and TQ > 128:
        TQ = _round_up(TQ // 2, 128)
    T_pad = _round_up(T_exact, TQ)
    num_q = T_pad // TQ

    # VMEM budget for this tiling (double-buffered blocks + in-kernel
    # intermediates); clamp to 64 MiB so we never overshoot v7x physical VMEM.
    itemsize = jnp.dtype(xs.dtype).itemsize
    blk_bytes = (Tmax * D + TQ * D) * itemsize + 2 * Tmax * 4
    scratch_bytes = TQ * Tmax * itemsize + TQ * D * 4  # onehot + f32 acc
    vmem_limit = int(min(max(2 * blk_bytes + scratch_bytes + (2 << 20),
                             32 << 20), 64 << 20))

    # Reshape scalar-row inputs to (B, 1, Tmax) so each block's last two dims
    # equal the full array dims (TPU tiling rule).
    ce3 = ce[:, None, :]
    c3 = c[:, None, :]

    grid_spec = pltpu.PrefetchScalarGridSpec(
        num_scalar_prefetch=1,          # totals -> SMEM, visible to index_maps
        grid=(B, num_q),
        in_specs=[
            # Inputs depend only on b -> stay resident across the q axis.
            pl.BlockSpec((1, 1, Tmax), lambda b, q, tot: (b, 0, 0)),
            pl.BlockSpec((1, 1, Tmax), lambda b, q, tot: (b, 0, 0)),
            pl.BlockSpec((1, Tmax, D), lambda b, q, tot: (b, 0, 0)),
        ],
        out_specs=pl.BlockSpec((1, TQ, D), lambda b, q, tot: (b, q, 0)),
    )

    out = pl.pallas_call(
        _length_regulator_kernel,
        out_shape=jax.ShapeDtypeStruct((B, T_pad, D), xs.dtype),
        grid_spec=grid_spec,
        compiler_params=pltpu.CompilerParams(
            dimension_semantics=("parallel", "parallel"),
            vmem_limit_bytes=vmem_limit),
    )(totals, ce3, c3, xs)

    if return_padded:
        return out
    # Trim padding frames so the returned shape matches the module (B, T*, D).
    if T_pad != T_exact:
        out = out[:, :T_exact, :]
    return out


def _reference_numpy(xs, ds, ilens, alpha=1.0):
    """Pure-NumPy replica of the PyTorch forward (for verification)."""
    xs = np.asarray(xs)
    ds = np.asarray(ds).astype(np.int64)
    ilens = np.asarray(ilens).astype(np.int64)
    if alpha != 1.0:
        ds = np.round(ds.astype(np.float64) * alpha).astype(np.int64)
    seqs = []
    for b in range(xs.shape[0]):
        x = xs[b, : ilens[b]]
        d = ds[b, : ilens[b]].copy()
        if d.sum() == 0:
            d[:] = 1
        rep = [np.repeat(x[i:i + 1], int(d[i]), axis=0)
               for i in range(len(d)) if d[i] != 0]
        seqs.append(np.concatenate(rep, axis=0))
    max_len = max(s.shape[0] for s in seqs)
    out = np.zeros((xs.shape[0], max_len, xs.shape[-1]), dtype=xs.dtype)
    for b, s in enumerate(seqs):
        out[b, : s.shape[0]] = s
    return out


if __name__ == "__main__":
    key = jax.random.PRNGKey(0)
    B, Tmax, D = 2, 8, 32
    kx, kd = jax.random.split(key)

    xs = jax.random.normal(kx, (B, Tmax, D), dtype=jnp.float32)
    ds = jax.random.randint(kd, (B, Tmax), 0, 4, dtype=jnp.int32)
    ilens = jnp.array([8, 5], dtype=jnp.int32)

    # Exact-shape path (matches the PyTorch module's data-dependent T*).
    out = jax.block_until_ready(length_regulator(xs, ds, ilens, alpha=1.0))
    ref = _reference_numpy(np.asarray(xs), np.asarray(ds), np.asarray(ilens))
    assert out.shape == ref.shape, (out.shape, ref.shape)
    np.testing.assert_allclose(np.asarray(out), ref, rtol=1e-5, atol=1e-5)

    # alpha != 1.0.
    out2 = jax.block_until_ready(length_regulator(xs, ds, ilens, alpha=1.5))
    ref2 = _reference_numpy(np.asarray(xs), np.asarray(ds), np.asarray(ilens),
                            alpha=1.5)
    assert out2.shape == ref2.shape, (out2.shape, ref2.shape)
    np.testing.assert_allclose(np.asarray(out2), ref2, rtol=1e-5, atol=1e-5)

    # Static bucket + padded output (no host sync, no trailing slice).
    out3 = jax.block_until_ready(
        length_regulator(xs, ds, ilens, max_output_len=64, return_padded=True))
    T_ref = ref.shape[1]
    np.testing.assert_allclose(np.asarray(out3[:, :T_ref, :]), ref,
                               rtol=1e-5, atol=1e-5)
    np.testing.assert_allclose(np.asarray(out3[:, T_ref:, :]), 0.0)

    print("KERNEL_OK")
</pallas_src>

<mosaic_0001>
module attributes {stable_mosaic.version = 11 : i64} {
  func.func @_length_regulator_kernel(%arg0: i32, %arg1: i32, %arg2: memref<2xi32, #tpu.memory_space<smem>>, %arg3: memref<1x1x8xi32, #tpu.memory_space<vmem>>, %arg4: memref<1x1x8xi32, #tpu.memory_space<vmem>>, %arg5: memref<1x8x32xf32, #tpu.memory_space<vmem>>, %arg6: memref<1x128x32xf32, #tpu.memory_space<vmem>>) attributes {dimension_semantics = [#tpu.dimension_semantics<parallel>, #tpu.dimension_semantics<parallel>], iteration_bounds = array<i64: 2, 1>, scalar_prefetch = 1 : i64, scratch_operands = 0 : i64, tpu.core_type = #tpu.core_type<tc>, window_params = [{transform_indices = @transform_0, window_bounds = array<i64: 1, 1, 8>}, {transform_indices = @transform_1, window_bounds = array<i64: 1, 1, 8>}, {transform_indices = @transform_2, window_bounds = array<i64: 1, 8, 32>}, {transform_indices = @transform_3, window_bounds = array<i64: 1, 128, 32>}]} {
    %c128_i32 = arith.constant 128 : i32
    %0 = arith.muli %arg1, %c128_i32 : i32
    %1 = arith.index_cast %arg0 : i32 to index
    %2 = memref.load %arg2[%1] : memref<2xi32, #tpu.memory_space<smem>>
    %3 = arith.cmpi slt, %0, %2 : i32
    %4 = arith.extui %3 : i1 to i32
    %c0_i32 = arith.constant 0 : i32
    %5 = arith.cmpi ne, %4, %c0_i32 : i32
    scf.if %5 {
      %9 = tpu.iota {dimensions = array<i32: 0>} : vector<128x1xi32>
      %10 = vector.broadcast %0 : i32 to vector<128x1xi32>
      %11 = arith.addi %10, %9 : vector<128x1xi32>
      %c0 = arith.constant 0 : index
      %c0_1 = arith.constant 0 : index
      %c0_2 = arith.constant 0 : index
      %12 = vector.load %arg3[%c0, %c0_1, %c0_2] : memref<1x1x8xi32, #tpu.memory_space<vmem>>, vector<1x1x8xi32>
      %13 = vector.shape_cast %12 : vector<1x1x8xi32> to vector<1x8xi32>
      %c0_3 = arith.constant 0 : index
      %c0_4 = arith.constant 0 : index
      %c0_5 = arith.constant 0 : index
      %14 = vector.load %arg4[%c0_3, %c0_4, %c0_5] : memref<1x1x8xi32, #tpu.memory_space<vmem>>, vector<1x1x8xi32>
      %15 = vector.shape_cast %14 : vector<1x1x8xi32> to vector<1x8xi32>
      %16 = vector.broadcast %13 : vector<1x8xi32> to vector<128x8xi32>
      %17 = vector.broadcast %11 : vector<128x1xi32> to vector<128x8xi32>
      %18 = arith.cmpi sle, %16, %17 : vector<128x8xi32>
      %19 = vector.broadcast %11 : vector<128x1xi32> to vector<128x8xi32>
      %20 = vector.broadcast %15 : vector<1x8xi32> to vector<128x8xi32>
      %21 = arith.cmpi slt, %19, %20 : vector<128x8xi32>
      %22 = arith.andi %18, %21 : vector<128x8xi1>
      %23 = arith.extui %22 : vector<128x8xi1> to vector<128x8xi32>
      %24 = arith.sitofp %23 : vector<128x8xi32> to vector<128x8xf32>
      %c0_6 = arith.constant 0 : index
      %c0_7 = arith.constant 0 : index
      %c0_8 = arith.constant 0 : index
      %25 = vector.load %arg5[%c0_6, %c0_7, %c0_8] : memref<1x8x32xf32, #tpu.memory_space<vmem>>, vector<1x8x32xf32>
      %26 = vector.shape_cast %25 : vector<1x8x32xf32> to vector<8x32xf32>
      %cst = arith.constant dense<0.000000e+00> : vector<128x32xf32>
      %27 = tpu.matmul %24, %26, %cst {dimension_numbers = #tpu.dot_dimension_numbers<[1], [0], [0], [1], [0, 0, 1, 1], [], []>} : vector<128x8xf32>, vector<8x32xf32>, vector<128x32xf32> -> vector<128x32xf32>
      %c0_9 = arith.constant 0 : index
      %c0_10 = arith.constant 0 : index
      %c0_11 = arith.constant 0 : index
      %28 = vector.load %arg6[%c0_9, %c0_10, %c0_11] : memref<1x128x32xf32, #tpu.memory_space<vmem>>, vector<1x128x32xf32>
      %29 = vector.shape_cast %28 : vector<1x128x32xf32> to vector<128x32xf32>
      %30 = vector.shape_cast %27 : vector<128x32xf32> to vector<1x128x32xf32>
      tpu.vector_store %arg6[%c0_9, %c0_10, %c0_11], %30 {strides = array<i32>} : memref<1x128x32xf32, #tpu.memory_space<vmem>>, vector<1x128x32xf32>,
    } else {
    }
    %6 = arith.cmpi sge, %0, %2 : i32
    %7 = arith.extui %6 : i1 to i32
    %c0_i32_0 = arith.constant 0 : i32
    %8 = arith.cmpi ne, %7, %c0_i32_0 : i32
    scf.if %8 {
      %cst = arith.constant 0.000000e+00 : f32
      %9 = vector.broadcast %cst : f32 to vector<1x128x32xf32>
      %c0 = arith.constant 0 : index
      %c0_1 = arith.constant 0 : index
      %c0_2 = arith.constant 0 : index
      %10 = vector.load %arg6[%c0, %c0_1, %c0_2] : memref<1x128x32xf32, #tpu.memory_space<vmem>>, vector<1x128x32xf32>
      tpu.vector_store %arg6[%c0, %c0_1, %c0_2], %9 {strides = array<i32>} : memref<1x128x32xf32, #tpu.memory_space<vmem>>, vector<1x128x32xf32>,
    } else {
    }
    return
  }
  func.func @transform_0(%arg0: i32, %arg1: i32, %arg2: memref<2xi32, #tpu.memory_space<smem>>) -> (i32, i32, i32) {
    %c0_i32 = arith.constant 0 : i32
    %c0_i32_0 = arith.constant 0 : i32
    %c0_i32_1 = arith.constant 0 : i32
    return %arg0, %c0_i32, %c0_i32_0 : i32, i32, i32
  }
  func.func @transform_1(%arg0: i32, %arg1: i32, %arg2: memref<2xi32, #tpu.memory_space<smem>>) -> (i32, i32, i32) {
    %c0_i32 = arith.constant 0 : i32
    %c0_i32_0 = arith.constant 0 : i32
    %c0_i32_1 = arith.constant 0 : i32
    return %arg0, %c0_i32, %c0_i32_0 : i32, i32, i32
  }
  func.func @transform_2(%arg0: i32, %arg1: i32, %arg2: memref<2xi32, #tpu.memory_space<smem>>) -> (i32, i32, i32) {
    %c0_i32 = arith.constant 0 : i32
    %c0_i32_0 = arith.constant 0 : i32
    %c0_i32_1 = arith.constant 0 : i32
    return %arg0, %c0_i32, %c0_i32_0 : i32, i32, i32
  }
  func.func @transform_3(%arg0: i32, %arg1: i32, %arg2: memref<2xi32, #tpu.memory_space<smem>>) -> (i32, i32, i32) {
    %c0_i32 = arith.constant 0 : i32
    %c0_i32_0 = arith.constant 0 : i32
    return %arg0, %arg1, %c0_i32 : i32, i32, i32
  }
}

</mosaic_0001>

<llo_original>
// kernel: tpu_custom_call.1
$region0: #{tpu_custom_call.1}
  #allocation0 [shape = 'u32[]', space=smem, size = 0x4, offset = 0x4, fixed_abs, tag = 'smem constant byte address 0x4 - core index']
  #allocation1 [shape = 'u32[144,128]{1,0:T(1,128)}', space=vmem, size = 0x12000, scoped, tag = 'internal scratch']
  #allocation2 [shape = 's32[1]{0}', space=sflag, size = 0x4, scoped, tag = 'scoped memory for tpu_custom_call.1']
  #allocation3 [shape = 'u8[512]{0}', space=smem, size = 0x200, scoped, tag = 'prefetched SMEM operand 0']
  %s0 = inlined_call_operand.hbm [shape: s32[2], index: 0, kind: input, shape index: {}]
  %s1 = inlined_call_operand.hbm [shape: s32[2,1,8], index: 1, kind: input, shape index: {}]
  %s2 = inlined_call_operand.vmem [shape: s32[2,1,8], index: 2, kind: input, shape index: {}]
  %s3 = inlined_call_operand.hbm [shape: f32[2,8,32], index: 3, kind: input, shape index: {}]
  %s4 = inlined_call_operand.vmem [shape: f32[2,128,32], index: 4, kind: output, shape index: {}]
  %s5 = sld [smem:[#allocation0]]
  $region61: #{tpu_custom_call.1} parent=0
    _
  %s7 = ssub.s32 1, %s5
  %s8 = scalar_select 0, %s7, %s5
  %10 = dma.hbm_to_smem %s0, 16, [#allocation3], [#allocation2]
  %11 = dma.done [#allocation2], 16
  %12 = sfence
  $region1: #{tpu_custom_call.1} parent=0
    #allocation4 [shape = 'u8[1024]{0}', space=vmem, size = 0x400, scoped, tag = 'input window, operand 1']
    #allocation5 [shape = 's32[2]{0}', space=sflag, size = 0x8, scoped, tag = 'scoped memory for tpu_custom_call.1']
    #allocation6 [shape = 'u8[8192]{0}', space=vmem, size = 0x2000, scoped, tag = 'input window, operand 3']
    #allocation7 [shape = 's32[2]{0}', space=sflag, size = 0x8, scoped, tag = 'scoped memory for tpu_custom_call.1']
    %13 = vsyncpa [#allocation5], 0
    %s14 = scalar_lea.sflag [#allocation5], 1
    %15 = vsyncpa %s14, 0
    %16 = vsyncpa [#allocation7], 0
    %s17 = scalar_lea.sflag [#allocation7], 1
    %18 = vsyncpa %s17, 0
    loop: start=0, step=1, limit=4
    $region2: #{tpu_custom_call.1} parent=1 // loop_pre_header
      _
    $region3: #{tpu_custom_call.1} parent=1 // loop_header
      %s20 = sphi 0, %s24
      %p21 = scmp.ge.s32.totalorder %s20, 4
      %s27 = sphi 0, %s39
      %s28 = sphi 0, %s35
      %s29 = sphi 0, %s27
      %s30 = sphi 0, %s28
      %s31 = sphi 0, %s29
      %s32 = sphi 0, %s30
      %s42 = sphi 0, %s44
      %s45 = sphi 0, %s42
      %s46 = sphi 0, %s45
      %s62 = sphi 0, %s46
      %s68 = sphi 0, %s70
      %s71 = sphi 0, %s68
      %s72 = sphi 0, %s71
      %s88 = sphi 0, %s72
      %s94 = sphi 0, %s96
      %s97 = sphi 0, %s94
      %s98 = sphi 0, %s97
      %s114 = sphi 0, %s98
      %s122 = sphi 0, %s124
      %s125 = sphi 0, %s122
      %s126 = sphi 0, %s125
      %s142 = sphi 0, %s126
    $region4: #{tpu_custom_call.1} parent=1 // loop_header_branch
      %23 = sbr.rel (%p21) target = $region8
    $region5: #{tpu_custom_call.1} parent=1 // loop_body
      %s25 = ssub.s32 %s20, 1
      %s26 = ssub.s32 %s20, 2
      %s33 = sadd.s32 1, %s28
      %p34 = scmp.ge.s32.totalorder %s33, 1
      %s35 = scalar_select %p34, 0, %s33
      %s36 = sadd.s32 1, %s27
      %s37 = scalar_select %p34, %s36, %s27
      %p38 = scmp.ge.s32.totalorder %s37, 2
      %s39 = scalar_select %p38, 0, %s37
      %s40 = ssub.s32 %s27, %s39
      %p41 = scmp.eq.s32.totalorder %s40, 0
      %s43 = sadd.s32 %s42, 1
      %s44 = scalar_select %p41, %s42, %s43
      %p47 = pneg %p41
      %p48 = scmp.eq.s32.totalorder %s20, 1
      %p49 = por %p47, %p48
      %p50 = scmp.ne.s32.totalorder %s42, %s45
      %p51 = scmp.eq.s32.totalorder %s20, 0
      %p52 = por %p50, %p51
      %p53 = scmp.ne.s32.totalorder %s42, %s45
      %p54 = scmp.eq.s32.totalorder %s25, 1
      %p55 = por %p53, %p54
      %p56 = scmp.ne.s32.totalorder %s45, %s46
      %p57 = scmp.eq.s32.totalorder %s25, 0
      %p58 = por %p56, %p57
      %p59 = scmp.ne.s32.totalorder %s45, %s46
      %p60 = scmp.eq.s32.totalorder %s26, 1
      %p61 = por %p59, %p60
      %p63 = scmp.ne.s32.totalorder %s46, %s62
      %p64 = scmp.eq.s32.totalorder %s26, 0
      %p65 = por %p63, %p64
      %s66 = ssub.s32 %s27, %s39
      %p67 = scmp.eq.s32.totalorder %s66, 0
      %s69 = sadd.s32 %s68, 1
      %s70 = scalar_select %p67, %s68, %s69
      %p73 = pneg %p67
      %p74 = scmp.eq.s32.totalorder %s20, 1
      %p75 = por %p73, %p74
      %p76 = scmp.ne.s32.totalorder %s68, %s71
      %p77 = scmp.eq.s32.totalorder %s20, 0
      %p78 = por %p76, %p77
      %p79 = scmp.ne.s32.totalorder %s68, %s71
      %p80 = scmp.eq.s32.totalorder %s25, 1
      %p81 = por %p79, %p80
      %p82 = scmp.ne.s32.totalorder %s71, %s72
      %p83 = scmp.eq.s32.totalorder %s25, 0
      %p84 = por %p82, %p83
      %p85 = scmp.ne.s32.totalorder %s71, %s72
      %p86 = scmp.eq.s32.totalorder %s26, 1
      %p87 = por %p85, %p86
      %p89 = scmp.ne.s32.totalorder %s72, %s88
      %p90 = scmp.eq.s32.totalorder %s26, 0
      %p91 = por %p89, %p90
      %s92 = ssub.s32 %s27, %s39
      %p93 = scmp.eq.s32.totalorder %s92, 0
      %s95 = sadd.s32 %s94, 1
      %s96 = scalar_select %p93, %s94, %s95
      %p99 = pneg %p93
      %p100 = scmp.eq.s32.totalorder %s20, 1
      %p101 = por %p99, %p100
      %p102 = scmp.ne.s32.totalorder %s94, %s97
      %p103 = scmp.eq.s32.totalorder %s20, 0
      %p104 = por %p102, %p103
      %p105 = scmp.ne.s32.totalorder %s94, %s97
      %p106 = scmp.eq.s32.totalorder %s25, 1
      %p107 = por %p105, %p106
      %p108 = scmp.ne.s32.totalorder %s97, %s98
      %p109 = scmp.eq.s32.totalorder %s25, 0
      %p110 = por %p108, %p109
      %p111 = scmp.ne.s32.totalorder %s97, %s98
      %p112 = scmp.eq.s32.totalorder %s26, 1
      %p113 = por %p111, %p112
      %p115 = scmp.ne.s32.totalorder %s98, %s114
      %p116 = scmp.eq.s32.totalorder %s26, 0
      %p117 = por %p115, %p116
      %s118 = ssub.s32 %s27, %s39
      %s119 = ssub.s32 %s28, %s35
      %s120 = sor.u32 %s118, %s119
      %p121 = scmp.eq.s32.totalorder %s120, 0
      %s123 = sadd.s32 %s122, 1
      %s124 = scalar_select %p121, %s122, %s123
      %p127 = pneg %p121
      %p128 = scmp.eq.s32.totalorder %s20, 1
      %p129 = por %p127, %p128
      %p130 = scmp.ne.s32.totalorder %s122, %s125
      %p131 = scmp.eq.s32.totalorder %s20, 0
      %p132 = por %p130, %p131
      %p133 = scmp.ne.s32.totalorder %s122, %s125
      %p134 = scmp.eq.s32.totalorder %s25, 1
      %p135 = por %p133, %p134
      %p136 = scmp.ne.s32.totalorder %s125, %s126
      %p137 = scmp.eq.s32.totalorder %s25, 0
      %p138 = por %p136, %p137
      %p139 = scmp.ne.s32.totalorder %s125, %s126
      %p140 = scmp.eq.s32.totalorder %s26, 1
      %p141 = por %p139, %p140
      %p143 = scmp.ne.s32.totalorder %s126, %s142
      %p144 = scmp.eq.s32.totalorder %s26, 0
      %p145 = por %p143, %p144
      %p146 = scmp.le.s32.totalorder 1, %s20
      %p147 = scmp.lt.s32.totalorder %s20, 3
      %p148 = pnand %p146, %p147
      %p149 = pneg %p148
      // Predicated region
      $region9: #{tpu_custom_call.1} parent=5 // pred_check
        _
      $region10: #{tpu_custom_call.1} parent=5 // pred_check_branch
        %151 = sbr.rel (%p148) target = $region12
      $region11: #{tpu_custom_call.1} parent=5 // pred_region
        %s152 = ssub.s32 %s20, 1
      $region12: #{tpu_custom_call.1} parent=5 // pred_fallthru
        _
      %p153 = scmp.lt.s32.totalorder %s20, 2
      // Predicated region
      $region13: #{tpu_custom_call.1} parent=5 // pred_check
        %p154 = pneg %p153
      $region14: #{tpu_custom_call.1} parent=5 // pred_check_branch
        %156 = sbr.rel (%p154) target = $region16
      $region15: #{tpu_custom_call.1} parent=5 // pred_region
        // Predicated region
        $region17: #{tpu_custom_call.1} parent=15 // pred_check
          %p157 = pneg %p52
        $region18: #{tpu_custom_call.1} parent=15 // pred_check_branch
          %159 = sbr.rel (%p157) target = $region20
        $region19: #{tpu_custom_call.1} parent=15 // pred_region
          %s160 = sand.u32 %s42, 1
          %s161 = scalar_lea.sflag [#allocation5], %s160
          %s162 = sand.u32 %s42, 1
          %s163 = scalar_lea.vmem [#allocation4], %s162
          %s165 = ssub.s32 16, 16
          %166 = vsyncadd %s161, %s165
          %s167 = smul.addr %s27, 16
          %s168 = scalar_lea.hbm %s1, %s167
          %s170 = sshll.u32 %s163, 4
          %s171 = int_to_ptr.vmem [resolvable:$true] %s170
          %173 = dma.hbm_to_vmem [thread:$0]  %s168, 16, %s171, %s161
        $region20: #{tpu_custom_call.1} parent=15 // pred_fallthru
          _
        // Predicated region
        $region21: #{tpu_custom_call.1} parent=15 // pred_check
          %p174 = pneg %p78
        $region22: #{tpu_custom_call.1} parent=15 // pred_check_branch
          %176 = sbr.rel (%p174) target = $region24
        $region23: #{tpu_custom_call.1} parent=15 // pred_region
          %p177 = scmp.lt.s32.totalorder %s27, 1
          %s178 = scalar_select %p177, %s27, 1
          %s179 = scalar_lea.vmem %s2, %s178
        $region24: #{tpu_custom_call.1} parent=15 // pred_fallthru
          _
        // Predicated region
        $region25: #{tpu_custom_call.1} parent=15 // pred_check
          %p180 = pneg %p104
        $region26: #{tpu_custom_call.1} parent=15 // pred_check_branch
          %182 = sbr.rel (%p180) target = $region28
        $region27: #{tpu_custom_call.1} parent=15 // pred_region
          %s183 = sand.u32 %s94, 1
          %s184 = scalar_lea.sflag [#allocation7], %s183
          %s185 = sand.u32 %s94, 1
          %s186 = smul.addr %s185, 8
          %s187 = scalar_lea.vmem [#allocation6], %s186
          %s189 = ssub.s32 128, 128
          %190 = vsyncadd %s184, %s189
          %s191 = smul.addr %s27, 128
          %s192 = scalar_lea.hbm %s3, %s191
          %s194 = sshll.u32 %s187, 4
          %s195 = int_to_ptr.vmem [resolvable:$true] %s194
          %197 = dma.hbm_to_vmem [thread:$0]  %s192, 128, %s195, %s184
        $region28: #{tpu_custom_call.1} parent=15 // pred_fallthru
          _
      $region16: #{tpu_custom_call.1} parent=5 // pred_fallthru
        _
      %p198 = scmp.le.s32.totalorder 1, %s20
      %p199 = scmp.lt.s32.totalorder %s20, 3
      %p200 = pnand %p198, %p199
      %p201 = pneg %p200
      // Predicated region
      $region29: #{tpu_custom_call.1} parent=5 // pred_check
        _
      $region30: #{tpu_custom_call.1} parent=5 // pred_check_branch
        %203 = sbr.rel (%p200) target = $region32
      $region31: #{tpu_custom_call.1} parent=5 // pred_region
        %s204 = ssub.s32 %s20, 1
        %s205 = sand.u32 %s45, 1
        %s206 = scalar_lea.sflag [#allocation5], %s205
        %s207 = sand.u32 %s45, 1
        %s208 = scalar_lea.vmem [#allocation4], %s207
        // Predicated region
        $region33: #{tpu_custom_call.1} parent=31 // pred_check
          %p209 = pneg %p58
        $region34: #{tpu_custom_call.1} parent=31 // pred_check_branch
          %211 = sbr.rel (%p209) target = $region36
        $region35: #{tpu_custom_call.1} parent=31 // pred_region
          %212 = dma.done %s206, 16
        $region36: #{tpu_custom_call.1} parent=31 // pred_fallthru
          _
        %s213 = sand.u32 %s97, 1
        %s214 = scalar_lea.sflag [#allocation7], %s213
        %s215 = sand.u32 %s97, 1
        %s216 = smul.addr %s215, 8
        %s217 = scalar_lea.vmem [#allocation6], %s216
        // Predicated region
        $region37: #{tpu_custom_call.1} parent=31 // pred_check
          %p218 = pneg %p110
        $region38: #{tpu_custom_call.1} parent=31 // pred_check_branch
          %220 = sbr.rel (%p218) target = $region40
        $region39: #{tpu_custom_call.1} parent=31 // pred_region
          %221 = dma.done %s214, 128
        $region40: #{tpu_custom_call.1} parent=31 // pred_fallthru
          _
        %s222 = sand.u32 %s45, 1
        %s223 = scalar_lea.sflag [#allocation5], %s222
        %s224 = sand.u32 %s45, 1
        %s225 = scalar_lea.vmem [#allocation4], %s224
        %p226 = pneg %p58
        %p227 = pneg %p55
        %p228 = scmp.lt.s32.totalorder %s29, 1
        %s229 = scalar_select %p228, %s29, 1
        %s230 = scalar_lea.vmem %s2, %s229
        %p231 = pneg %p84
        %p232 = pneg %p81
        %s233 = sand.u32 %s97, 1
        %s234 = scalar_lea.sflag [#allocation7], %s233
        %s235 = sand.u32 %s97, 1
        %s236 = smul.addr %s235, 8
        %s237 = scalar_lea.vmem [#allocation6], %s236
        %p238 = pneg %p110
        %p239 = pneg %p107
        %p240 = pneg %p138
        %p241 = pneg %p135
        %s242 = smul.u32 16, %s30
        %p243 = scmp.lt.s32.totalorder %s29, 1
        %s244 = scalar_select %p243, %s29, 1
        %p245 = scmp.lt.s32.totalorder %s242, 15
        %s246 = scalar_select %p245, %s242, 15
        %s247 = smul.addr %s244, 16
        %s248 = sadd.s32 %s246, %s247
        %s249 = smul.addr %s248, 8
        %s250 = scalar_lea.vmem %s4, %s249
        %p251 = scmp.lt.s32.totalorder %s29, 1
        %s252 = scalar_select %p251, %s29, 1
        %s253 = scalar_lea.vmem %s2, %s252
        %s254 = smul.u32 16, %s30
        %p255 = scmp.lt.s32.totalorder %s29, 1
        %s256 = scalar_select %p255, %s29, 1
        %p257 = scmp.lt.s32.totalorder %s254, 15
        %s258 = scalar_select %p257, %s254, 15
        %s259 = smul.addr %s256, 16
        %s260 = sadd.s32 %s258, %s259
        %s261 = smul.addr %s260, 8
        %s262 = scalar_lea.vmem %s4, %s261
        %s263 = smul.u32 16, %s30
        %s264 = smul.u32 %s30, 128
        %s265 = sld [smem:[#allocation3 + %s29]]
        %p266 = scmp.lt.s32.totalorder %s264, %s265
        // Predicated region
        $region41: #{tpu_custom_call.1} parent=31 // pred_check
          %p267 = pneg %p266
        $region42: #{tpu_custom_call.1} parent=31 // pred_check_branch
          %269 = sbr.rel (%p267) target = $region44
        $region43: #{tpu_custom_call.1} parent=31 // pred_region
          %v270 = vlaneseq
          %v271 = vshrl.u32 %v270, 7
          %v272 = vadd.s32 %v271, 8
          %v273 = vadd.s32 %v271, 16
          %v274 = vadd.s32 %v271, 24
          %v275 = vadd.s32 %v271, 32
          %v276 = vadd.s32 %v271, 40
          %v277 = vadd.s32 %v271, 48
          %v278 = vadd.s32 %v271, 56
          %v279 = vadd.s32 %v271, 64
          %v280 = vadd.s32 %v271, 72
          %v281 = vadd.s32 %v271, 80
          %v282 = vadd.s32 %v271, 88
          %v283 = vadd.s32 %v271, 96
          %v284 = vadd.s32 %v271, 104
          %v285 = vadd.s32 %v271, 112
          %v286 = vadd.s32 %v271, 120
          %v287 = vstv %s264
          %v288 = vadd.s32 %v287, %v271
          %v289 = vadd.s32 %v287, %v272
          %v290 = vadd.s32 %v287, %v273
          %v291 = vadd.s32 %v287, %v274
          %v292 = vadd.s32 %v287, %v275
          %v293 = vadd.s32 %v287, %v276
          %v294 = vadd.s32 %v287, %v277
          %v295 = vadd.s32 %v287, %v278
          %v296 = vadd.s32 %v287, %v279
          %v297 = vadd.s32 %v287, %v280
          %v298 = vadd.s32 %v287, %v281
          %v299 = vadd.s32 %v287, %v282
          %v300 = vadd.s32 %v287, %v283
          %v301 = vadd.s32 %v287, %v284
          %v302 = vadd.s32 %v287, %v285
          %v303 = vadd.s32 %v287, %v286
          %v304 = vld [vmem:[%s208] sm:$0x1]
          %v305 = vld [vmem:[%s253] sm:$0x1]
          %v306 = vlaneseq
          %v307 = vshrl.u32 %v306, 7
          %v308 = vsub.s32 0, %v307
          %v309 = vrot.slane %v304, %v308
          %vm310 = vcmp.le.s32.totalorder %v309, %v288
          %vm311 = vcmp.le.s32.totalorder %v309, %v289
          %vm312 = vcmp.le.s32.totalorder %v309, %v290
          %vm313 = vcmp.le.s32.totalorder %v309, %v291
          %vm314 = vcmp.le.s32.totalorder %v309, %v292
          %vm315 = vcmp.le.s32.totalorder %v309, %v293
          %vm316 = vcmp.le.s32.totalorder %v309, %v294
          %vm317 = vcmp.le.s32.totalorder %v309, %v295
          %vm318 = vcmp.le.s32.totalorder %v309, %v296
          %vm319 = vcmp.le.s32.totalorder %v309, %v297
          %vm320 = vcmp.le.s32.totalorder %v309, %v298
          %vm321 = vcmp.le.s32.totalorder %v309, %v299
          %vm322 = vcmp.le.s32.totalorder %v309, %v300
          %vm323 = vcmp.le.s32.totalorder %v309, %v301
          %vm324 = vcmp.le.s32.totalorder %v309, %v302
          %vm325 = vcmp.le.s32.totalorder %v309, %v303
          %v326 = vlaneseq
          %v327 = vshrl.u32 %v326, 7
          %v328 = vsub.s32 0, %v327
          %v329 = vrot.slane %v305, %v328
          %vm330 = vcmp.lt.s32.totalorder %v288, %v329
          %vm331 = vcmp.lt.s32.totalorder %v289, %v329
          %vm332 = vcmp.lt.s32.totalorder %v290, %v329
          %vm333 = vcmp.lt.s32.totalorder %v291, %v329
          %vm334 = vcmp.lt.s32.totalorder %v292, %v329
          %vm335 = vcmp.lt.s32.totalorder %v293, %v329
          %vm336 = vcmp.lt.s32.totalorder %v294, %v329
          %vm337 = vcmp.lt.s32.totalorder %v295, %v329
          %vm338 = vcmp.lt.s32.totalorder %v296, %v329
          %vm339 = vcmp.lt.s32.totalorder %v297, %v329
          %vm340 = vcmp.lt.s32.totalorder %v298, %v329
          %vm341 = vcmp.lt.s32.totalorder %v299, %v329
          %vm342 = vcmp.lt.s32.totalorder %v300, %v329
          %vm343 = vcmp.lt.s32.totalorder %v301, %v329
          %vm344 = vcmp.lt.s32.totalorder %v302, %v329
          %vm345 = vcmp.lt.s32.totalorder %v303, %v329
          %vm346 = vmand %vm310, %vm330
          %vm347 = vmand %vm311, %vm331
          %vm348 = vmand %vm312, %vm332
          %vm349 = vmand %vm313, %vm333
          %vm350 = vmand %vm314, %vm334
          %vm351 = vmand %vm315, %vm335
          %vm352 = vmand %vm316, %vm336
          %vm353 = vmand %vm317, %vm337
          %vm354 = vmand %vm318, %vm338
          %vm355 = vmand %vm319, %vm339
          %vm356 = vmand %vm320, %vm340
          %vm357 = vmand %vm321, %vm341
          %vm358 = vmand %vm322, %vm342
          %vm359 = vmand %vm323, %vm343
          %vm360 = vmand %vm324, %vm344
          %vm361 = vmand %vm325, %vm345
          %v362 = vsel %vm346, 1, 0
          %v363 = vsel %vm347, 1, 0
          %v364 = vsel %vm348, 1, 0
          %v365 = vsel %vm349, 1, 0
          %v366 = vsel %vm350, 1, 0
          %v367 = vsel %vm351, 1, 0
          %v368 = vsel %vm352, 1, 0
          %v369 = vsel %vm353, 1, 0
          %v370 = vsel %vm354, 1, 0
          %v371 = vsel %vm355, 1, 0
          %v372 = vsel %vm356, 1, 0
          %v373 = vsel %vm357, 1, 0
          %v374 = vsel %vm358, 1, 0
          %v375 = vsel %vm359, 1, 0
          %v376 = vsel %vm360, 1, 0
          %v377 = vsel %vm361, 1, 0
          %v378 = vcvt.s32.f32 %v362
          %v379 = vcvt.s32.f32 %v363
          %v380 = vcvt.s32.f32 %v364
          %v381 = vcvt.s32.f32 %v365
          %v382 = vcvt.s32.f32 %v366
          %v383 = vcvt.s32.f32 %v367
          %v384 = vcvt.s32.f32 %v368
          %v385 = vcvt.s32.f32 %v369
          %v386 = vcvt.s32.f32 %v370
          %v387 = vcvt.s32.f32 %v371
          %v388 = vcvt.s32.f32 %v372
          %v389 = vcvt.s32.f32 %v373
          %v390 = vcvt.s32.f32 %v374
          %v391 = vcvt.s32.f32 %v375
          %v392 = vcvt.s32.f32 %v376
          %v393 = vcvt.s32.f32 %v377
          %v394 = vld [vmem:[%s217] sm:$0xff]
          %vm395 = vcmask 64512
          %v397 = vsel %vm395, %v378, 0
          %v400 = vsel %vm395, %v379, 0
          %v403 = vsel %vm395, %v380, 0
          %v406 = vsel %vm395, %v381, 0
          %v409 = vsel %vm395, %v382, 0
          %v412 = vsel %vm395, %v383, 0
          %v415 = vsel %vm395, %v384, 0
          %v418 = vsel %vm395, %v385, 0
          %v421 = vsel %vm395, %v386, 0
          %v424 = vsel %vm395, %v387, 0
          %v427 = vsel %vm395, %v388, 0
          %v430 = vsel %vm395, %v389, 0
          %v433 = vsel %vm395, %v390, 0
          %v436 = vsel %vm395, %v391, 0
          %v439 = vsel %vm395, %v392, 0
          %v442 = vsel %vm395, %v393, 0
          %444 = vmatprep.subr.mxu0 0.0
          %445 = vmatpush1.msra.mxu0 0.0
          %446 = vmatprep.subr.mxu0 0.0
          %447 = vmatpush1.msra.mxu0 0.0
          %448 = vmatprep.subr.mxu0 0.0
          %449 = vmatpush1.msra.mxu0 0.0
          %450 = vmatprep.subr.mxu0 0.0
          %451 = vmatpush1.msra.mxu0 0.0
          %452 = vmatprep.subr.mxu0 0.0
          %453 = vmatpush1.msra.mxu0 0.0
          %454 = vmatprep.subr.mxu0 0.0
          %455 = vmatpush1.msra.mxu0 0.0
          %456 = vmatprep.subr.mxu0 0.0
          %457 = vmatpush1.msra.mxu0 0.0
          %458 = vmatprep.subr.mxu0 0.0
          %459 = vmatpush1.msra.mxu0 0.0
          %460 = vmatprep.subr.mxu0 0.0
          %461 = vmatpush1.msra.mxu0 0.0
          %462 = vmatprep.subr.mxu0 0.0
          %463 = vmatpush1.msra.mxu0 0.0
          %464 = vmatprep.subr.mxu0 0.0
          %465 = vmatpush1.msra.mxu0 0.0
          %466 = vmatprep.subr.mxu0 0.0
          %467 = vmatpush1.msra.mxu0 0.0
          %468 = vmatprep.subr.mxu0 0.0
          %469 = vmatpush1.msra.mxu0 0.0
          %470 = vmatprep.subr.mxu0 0.0
          %471 = vmatpush1.msra.mxu0 0.0
          %472 = vmatprep.subr.mxu0 0.0
          %473 = vmatpush1.msra.mxu0 0.0
          %474 = vmatprep.subr.mxu0 0.0
          %475 = vmatpush1.msra.mxu0 %v394
          %476 = vmatprep.subr.mxu0 0.0
          %477 = vmatpush2.msra.mxu0 0.0
          %478 = vmatprep.subr.mxu0 0.0
          %479 = vmatpush2.msra.mxu0 0.0
          %480 = vmatprep.subr.mxu0 0.0
          %481 = vmatpush2.msra.mxu0 0.0
          %482 = vmatprep.subr.mxu0 0.0
          %483 = vmatpush2.msra.mxu0 0.0
          %484 = vmatprep.subr.mxu0 0.0
          %485 = vmatpush2.msra.mxu0 0.0
          %486 = vmatprep.subr.mxu0 0.0
          %487 = vmatpush2.msra.mxu0 0.0
          %488 = vmatprep.subr.mxu0 0.0
          %489 = vmatpush2.msra.mxu0 0.0
          %490 = vmatprep.subr.mxu0 0.0
          %491 = vmatpush2.msra.mxu0 0.0
          %492 = vmatprep.subr.mxu0 0.0
          %493 = vmatpush2.msra.mxu0 0.0
          %494 = vmatprep.subr.mxu0 0.0
          %495 = vmatpush2.msra.mxu0 0.0
          %496 = vmatprep.subr.mxu0 0.0
          %497 = vmatpush2.msra.mxu0 0.0
          %498 = vmatprep.subr.mxu0 0.0
          %499 = vmatpush2.msra.mxu0 0.0
          %500 = vmatprep.subr.mxu0 0.0
          %501 = vmatpush2.msra.mxu0 0.0
          %502 = vmatprep.subr.mxu0 0.0
          %503 = vmatpush2.msra.mxu0 0.0
          %504 = vmatprep.subr.mxu0 0.0
          %505 = vmatpush2.msra.mxu0 0.0
          %506 = vmatprep.subr.mxu0 0.0
          %507 = vmatpush2.msra.mxu0 0.0
          %508 = vmatprep.mubr.f32.mxu0 0.0
          %509 = vmatmul.mubr.f32.gmra.mxu0 %v397
          %v510 = vpop.f32.mrf.mxu0
          %v511 = vadd.f32 0.0, %v510
          %v512 = vpop.f32.mrf.mxu0
          %513 = vmatprep.mubr.f32.mxu0 0.0
          %514 = vmatmul.mubr.f32.gmra.mxu0 %v400
          %v515 = vpop.f32.mrf.mxu0
          %v516 = vadd.f32 0.0, %v515
          %v517 = vpop.f32.mrf.mxu0
          %518 = vmatprep.mubr.f32.mxu0 0.0
          %519 = vmatmul.mubr.f32.gmra.mxu0 %v403
          %v520 = vpop.f32.mrf.mxu0
          %v521 = vadd.f32 0.0, %v520
          %v522 = vpop.f32.mrf.mxu0
          %523 = vmatprep.mubr.f32.mxu0 0.0
          %524 = vmatmul.mubr.f32.gmra.mxu0 %v406
          %v525 = vpop.f32.mrf.mxu0
          %v526 = vadd.f32 0.0, %v525
          %v527 = vpop.f32.mrf.mxu0
          %528 = vmatprep.mubr.f32.mxu0 0.0
          %529 = vmatmul.mubr.f32.gmra.mxu0 %v409
          %v530 = vpop.f32.mrf.mxu0
          %v531 = vadd.f32 0.0, %v530
          %v532 = vpop.f32.mrf.mxu0
          %533 = vmatprep.mubr.f32.mxu0 0.0
          %534 = vmatmul.mubr.f32.gmra.mxu0 %v412
          %v535 = vpop.f32.mrf.mxu0
          %v536 = vadd.f32 0.0, %v535
          %v537 = vpop.f32.mrf.mxu0
          %538 = vmatprep.mubr.f32.mxu0 0.0
          %539 = vmatmul.mubr.f32.gmra.mxu0 %v415
          %v540 = vpop.f32.mrf.mxu0
          %v541 = vadd.f32 0.0, %v540
          %v542 = vpop.f32.mrf.mxu0
          %543 = vmatprep.mubr.f32.mxu0 0.0
          %544 = vmatmul.mubr.f32.gmra.mxu0 %v418
          %v545 = vpop.f32.mrf.mxu0
          %v546 = vadd.f32 0.0, %v545
          %v547 = vpop.f32.mrf.mxu0
          %548 = vmatprep.mubr.f32.mxu0 0.0
          %549 = vmatmul.mubr.f32.gmra.mxu0 %v421
          %v550 = vpop.f32.mrf.mxu0
          %v551 = vadd.f32 0.0, %v550
          %v552 = vpop.f32.mrf.mxu0
          %553 = vmatprep.mubr.f32.mxu0 0.0
          %554 = vmatmul.mubr.f32.gmra.mxu0 %v424
          %v555 = vpop.f32.mrf.mxu0
          %v556 = vadd.f32 0.0, %v555
          %v557 = vpop.f32.mrf.mxu0
          %558 = vmatprep.mubr.f32.mxu0 0.0
          %559 = vmatmul.mubr.f32.gmra.mxu0 %v427
          %v560 = vpop.f32.mrf.mxu0
          %v561 = vadd.f32 0.0, %v560
          %v562 = vpop.f32.mrf.mxu0
          %563 = vmatprep.mubr.f32.mxu0 0.0
          %564 = vmatmul.mubr.f32.gmra.mxu0 %v430
          %v565 = vpop.f32.mrf.mxu0
          %v566 = vadd.f32 0.0, %v565
          %v567 = vpop.f32.mrf.mxu0
          %568 = vmatprep.mubr.f32.mxu0 0.0
          %569 = vmatmul.mubr.f32.gmra.mxu0 %v433
          %v570 = vpop.f32.mrf.mxu0
          %v571 = vadd.f32 0.0, %v570
          %v572 = vpop.f32.mrf.mxu0
          %573 = vmatprep.mubr.f32.mxu0 0.0
          %574 = vmatmul.mubr.f32.gmra.mxu0 %v436
          %v575 = vpop.f32.mrf.mxu0
          %v576 = vadd.f32 0.0, %v575
          %v577 = vpop.f32.mrf.mxu0
          %578 = vmatprep.mubr.f32.mxu0 0.0
          %579 = vmatmul.mubr.f32.gmra.mxu0 %v439
          %v580 = vpop.f32.mrf.mxu0
          %v581 = vadd.f32 0.0, %v580
          %v582 = vpop.f32.mrf.mxu0
          %583 = vmatprep.mubr.f32.mxu0 0.0
          %584 = vmatmul.mubr.f32.gmra.mxu0 %v442
          %v585 = vpop.f32.mrf.mxu0
          %v586 = vadd.f32 0.0, %v585
          %v587 = vpop.f32.mrf.mxu0
          %588 = vdwg.mxu0
          %vm589 = vcmask 261120
          %590 = vst.msk [vmem:[%s262] sm:$0xff] %vm589, %v511
          %591 = vst.msk [vmem:[%s262 + $0x8] sm:$0xff] %vm589, %v516
          %592 = vst.msk [vmem:[%s262 + $0x10] sm:$0xff] %vm589, %v521
          %593 = vst.msk [vmem:[%s262 + $0x18] sm:$0xff] %vm589, %v526
          %594 = vst.msk [vmem:[%s262 + $0x20] sm:$0xff] %vm589, %v531
          %595 = vst.msk [vmem:[%s262 + $0x28] sm:$0xff] %vm589, %v536
          %596 = vst.msk [vmem:[%s262 + $0x30] sm:$0xff] %vm589, %v541
          %597 = vst.msk [vmem:[%s262 + $0x38] sm:$0xff] %vm589, %v546
          %598 = vst.msk [vmem:[%s262 + $0x40] sm:$0xff] %vm589, %v551
          %599 = vst.msk [vmem:[%s262 + $0x48] sm:$0xff] %vm589, %v556
          %600 = vst.msk [vmem:[%s262 + $0x50] sm:$0xff] %vm589, %v561
          %601 = vst.msk [vmem:[%s262 + $0x58] sm:$0xff] %vm589, %v566
          %602 = vst.msk [vmem:[%s262 + $0x60] sm:$0xff] %vm589, %v571
          %603 = vst.msk [vmem:[%s262 + $0x68] sm:$0xff] %vm589, %v576
          %604 = vst.msk [vmem:[%s262 + $0x70] sm:$0xff] %vm589, %v581
          %605 = vst.msk [vmem:[%s262 + $0x78] sm:$0xff] %vm589, %v586
        $region44: #{tpu_custom_call.1} parent=31 // pred_fallthru
          _
        %p606 = scmp.ge.s32.totalorder %s264, %s265
        // Predicated region
        $region45: #{tpu_custom_call.1} parent=31 // pred_check
          %p607 = pneg %p606
        $region46: #{tpu_custom_call.1} parent=31 // pred_check_branch
          %609 = sbr.rel (%p607) target = $region48
        $region47: #{tpu_custom_call.1} parent=31 // pred_region
          %vm610 = vcmask 261120
          %611 = vst.msk [vmem:[%s262] sm:$0xff] %vm610, 0.0
          %612 = vst.msk [vmem:[%s262 + $0x8] sm:$0xff] %vm610, 0.0
          %613 = vst.msk [vmem:[%s262 + $0x10] sm:$0xff] %vm610, 0.0
          %614 = vst.msk [vmem:[%s262 + $0x18] sm:$0xff] %vm610, 0.0
          %615 = vst.msk [vmem:[%s262 + $0x20] sm:$0xff] %vm610, 0.0
          %616 = vst.msk [vmem:[%s262 + $0x28] sm:$0xff] %vm610, 0.0
          %617 = vst.msk [vmem:[%s262 + $0x30] sm:$0xff] %vm610, 0.0
          %618 = vst.msk [vmem:[%s262 + $0x38] sm:$0xff] %vm610, 0.0
          %619 = vst.msk [vmem:[%s262 + $0x40] sm:$0xff] %vm610, 0.0
          %620 = vst.msk [vmem:[%s262 + $0x48] sm:$0xff] %vm610, 0.0
          %621 = vst.msk [vmem:[%s262 + $0x50] sm:$0xff] %vm610, 0.0
          %622 = vst.msk [vmem:[%s262 + $0x58] sm:$0xff] %vm610, 0.0
          %623 = vst.msk [vmem:[%s262 + $0x60] sm:$0xff] %vm610, 0.0
          %624 = vst.msk [vmem:[%s262 + $0x68] sm:$0xff] %vm610, 0.0
          %625 = vst.msk [vmem:[%s262 + $0x70] sm:$0xff] %vm610, 0.0
          %626 = vst.msk [vmem:[%s262 + $0x78] sm:$0xff] %vm610, 0.0
        $region48: #{tpu_custom_call.1} parent=31 // pred_fallthru
          _
        %s627 = smul.u32 16, %s30
        %p628 = scmp.lt.s32.totalorder %s29, 1
        %s629 = scalar_select %p628, %s29, 1
        %p630 = scmp.lt.s32.totalorder %s627, 15
        %s631 = scalar_select %p630, %s627, 15
        %s632 = smul.addr %s629, 16
        %s633 = sadd.s32 %s631, %s632
        %s634 = smul.addr %s633, 8
        %s635 = scalar_lea.vmem %s4, %s634
        // Predicated region
        $region49: #{tpu_custom_call.1} parent=31 // pred_check
          %p636 = pneg %p135
        $region50: #{tpu_custom_call.1} parent=31 // pred_check_branch
          %638 = sbr.rel (%p636) target = $region52
        $region51: #{tpu_custom_call.1} parent=31 // pred_region
          %s639 = smul.u32 16, %s30
        $region52: #{tpu_custom_call.1} parent=31 // pred_fallthru
          _
      $region32: #{tpu_custom_call.1} parent=5 // pred_fallthru
        _
      %p640 = scmp.le.s32.totalorder 2, %s20
      // Predicated region
      $region53: #{tpu_custom_call.1} parent=5 // pred_check
        %p641 = pneg %p640
      $region54: #{tpu_custom_call.1} parent=5 // pred_check_branch
        %643 = sbr.rel (%p641) target = $region56
      $region55: #{tpu_custom_call.1} parent=5 // pred_region
        %s644 = ssub.s32 %s20, 2
        // Predicated region
        $region57: #{tpu_custom_call.1} parent=55 // pred_check
          %p645 = pneg %p141
        $region58: #{tpu_custom_call.1} parent=55 // pred_check_branch
          %647 = sbr.rel (%p645) target = $region60
        $region59: #{tpu_custom_call.1} parent=55 // pred_region
          %s648 = smul.u32 16, %s32
          %p649 = scmp.lt.s32.totalorder %s31, 1
          %s650 = scalar_select %p649, %s31, 1
          %p651 = scmp.lt.s32.totalorder %s648, 15
          %s652 = scalar_select %p651, %s648, 15
          %s653 = smul.addr %s650, 16
          %s654 = sadd.s32 %s652, %s653
          %s655 = smul.addr %s654, 8
          %s656 = scalar_lea.vmem %s4, %s655
        $region60: #{tpu_custom_call.1} parent=55 // pred_fallthru
          _
      $region56: #{tpu_custom_call.1} parent=5 // pred_fallthru
        _
    $region6: #{tpu_custom_call.1} parent=1 // loop_footer
      %s24 = sadd.s32 1, %s20
    $region7: #{tpu_custom_call.1} parent=1 // loop_footer_branch
      %19 = sbr.rel target = $region3
    $region8: #{tpu_custom_call.1} parent=1 // loop_exit
      _
    %657 = vsyncpa [#allocation5], 1
    %s658 = scalar_lea.sflag [#allocation5], 1
    %659 = vsyncpa %s658, 1
    %660 = vsyncpa [#allocation7], 1
    %s661 = scalar_lea.sflag [#allocation7], 1
    %662 = vsyncpa %s661, 1

</llo_original>
